<compile_context>
chip_gen: v5e
topology: v5e:2x2
jax: 0.10.0
libtpu: 0.0.40
codegen_flags: <defaults>
</compile_context>

<pallas_src>
import math

import jax
import jax.numpy as jnp
from jax.experimental import pallas as pl
from jax.experimental.pallas import tpu as pltpu


def _round_up(x, m):
    return ((x + m - 1) // m) * m


def _cdiv(a, b):
    return (a + b - 1) // b


def _pick_tile(total, desired, align):
    """Largest multiple of `align` <= desired that divides `total` (total % align == 0)."""
    t = max(align, (min(desired, total) // align) * align)
    while total % t != 0:
        t -= align
    return t


def _vmem_budget_bytes():
    """VMEM budget with headroom for compiler scratch/semaphores (v7x has only 64 MiB/TC)."""
    cap = None
    try:
        cap = int(pltpu.get_tpu_info().vmem_capacity_bytes)
    except Exception:
        cap = None
    if not cap or cap <= 0:
        cap = 64 * 1024 * 1024  # conservative: v7x per-TensorCore VMEM
    return (cap * 3) // 4


# --------------------------------------------------------------------------------
# Kernels
# --------------------------------------------------------------------------------
def _ffn_resident_kernel(x_ref, w1_ref, b1_ref, w2_ref, b2_ref, o_ref):
    """Full weights resident in VMEM; one grid step per row tile."""
    x = x_ref[...].astype(w1_ref.dtype)          # in-kernel bf16 cast (VPU, hidden under MXU)
    h = jnp.dot(x, w1_ref[...], preferred_element_type=jnp.float32)
    h = jnp.maximum(h + b1_ref[...], 0.0)
    # TODO(synk): dropout(p=0.1) is identity here (eval semantics); training mode would
    # mask `h` using pltpu.prng_seed / pltpu.prng_random_bits.
    out = jnp.dot(h.astype(w2_ref.dtype), w2_ref[...], preferred_element_type=jnp.float32)
    o_ref[...] = (out + b2_ref[...]).astype(o_ref.dtype)


def _ffn_streaming_kernel(x_ref, w1_ref, b1_ref, w2_ref, b2_ref, o_ref, acc_ref):
    """Hidden dim streamed in slices (reduction axis) with an f32 accumulator."""
    h_idx = pl.program_id(1)

    @pl.when(h_idx == 0)
    def _():
        acc_ref[...] = jnp.broadcast_to(b2_ref[...], acc_ref.shape)

    x = x_ref[...].astype(w1_ref.dtype)
    h = jnp.dot(x, w1_ref[...], preferred_element_type=jnp.float32)
    h = jnp.maximum(h + b1_ref[...], 0.0)
    # TODO(synk): dropout(p=0.1) is identity here (eval semantics).
    acc_ref[...] += jnp.dot(h.astype(w2_ref.dtype), w2_ref[...],
                            preferred_element_type=jnp.float32)

    @pl.when(h_idx == pl.num_programs(1) - 1)
    def _():
        o_ref[...] = acc_ref[...].astype(o_ref.dtype)


# --------------------------------------------------------------------------------
# Host-side wrapper
# --------------------------------------------------------------------------------
def prepare_ffn_params(w1, b1, w2, b2, matmul_dtype=jnp.bfloat16):
    """Pad (to multiples of 128) and cast the weights ONCE; cache across forward calls."""
    d_model, middle = w1.shape
    dp = _round_up(d_model, 128)
    mp = _round_up(middle, 128)
    w1p = jnp.pad(w1, ((0, dp - d_model), (0, mp - middle))).astype(matmul_dtype)
    w2p = jnp.pad(w2, ((0, mp - middle), (0, dp - d_model))).astype(matmul_dtype)
    b1p = jnp.pad(b1, (0, mp - middle)).reshape(1, mp).astype(jnp.float32)
    b2p = jnp.pad(b2, (0, dp - d_model)).reshape(1, dp).astype(jnp.float32)
    return dict(w1=w1p, b1=b1p, w2=w2p, b2=b2p, d_model=d_model, middle=middle)


def feedforward(x, params, *, tm=512, th=1024, out_dtype=None):
    """x: (..., d_model). `params` from prepare_ffn_params()."""
    d_model = params["d_model"]
    middle = params["middle"]
    w1p, b1p, w2p, b2p = params["w1"], params["b1"], params["w2"], params["b2"]
    dp, mp = w1p.shape

    lead_shape = x.shape[:-1]
    assert x.shape[-1] == d_model
    M = int(math.prod(lead_shape)) if lead_shape else 1

    out_dtype = x.dtype if out_dtype is None else out_dtype
    mm_bytes = jnp.dtype(w1p.dtype).itemsize
    x_bytes = jnp.dtype(x.dtype).itemsize
    out_bytes = jnp.dtype(out_dtype).itemsize

    budget = _vmem_budget_bytes()

    # ---- row tile: large enough to feed the MXU, but >= 2 tiles for big M (v7x megacore)
    tm = max(8, min(int(tm), _round_up(M, 8)))
    if M >= 512 and M <= tm:
        tm = _round_up(_cdiv(M, 2), 8)

    def resident_bytes(tm_):
        return (2 * tm_ * dp * x_bytes            # x (double-buffered)
                + 2 * tm_ * dp * out_bytes        # out (double-buffered)
                + 2 * 2 * dp * mp * mm_bytes      # W1 + W2 (assume 2 buffers each)
                + 2 * (mp + dp) * 4               # biases
                + tm_ * mp * 4                    # f32 intermediate h
                + tm_ * dp * 4)                   # f32 second-matmul result

    def streaming_bytes(tm_, th_):
        return (2 * tm_ * dp * x_bytes
                + 2 * tm_ * dp * out_bytes
                + 2 * 2 * dp * th_ * mm_bytes     # W1/W2 hidden slices (2 buffers each)
                + 2 * (th_ + dp) * 4
                + tm_ * dp * 4                    # acc scratch
                + tm_ * th_ * 4                   # f32 intermediate h slice
                + tm_ * dp * 4)                   # f32 partial second matmul

    use_resident = resident_bytes(tm) <= budget

    if not use_resident:
        th = _pick_tile(mp, min(int(th), mp), 128)
        while streaming_bytes(tm, th) > budget and th > 128:
            th = _pick_tile(mp, th - 128, 128)
        while streaming_bytes(tm, th) > budget and tm > 128:
            tm = _round_up(max(128, tm // 2), 8)

    Mp = _round_up(M, tm)
    n_row_tiles = Mp // tm

    # ---- pad x only (original dtype; bf16 cast happens inside the kernel) ----------
    x2d = x.reshape(M, d_model)
    if Mp != M or dp != d_model:
        x2d = jnp.pad(x2d, ((0, Mp - M), (0, dp - d_model)))

    flops = 4 * M * d_model * middle  # two matmuls, 2*M*K*N each
    weight_bytes = (w1p.size + w2p.size) * mm_bytes
    bias_bytes = (b1p.size + b2p.size) * 4
    act_bytes = Mp * dp * x_bytes + Mp * dp * out_bytes

    if use_resident:
        cost = pl.CostEstimate(flops=flops, transcendentals=0,
                               bytes_accessed=act_bytes + weight_bytes + bias_bytes)
        out2d = pl.pallas_call(
            _ffn_resident_kernel,
            out_shape=jax.ShapeDtypeStruct((Mp, dp), out_dtype),
            grid_spec=pltpu.PrefetchScalarGridSpec(
                num_scalar_prefetch=0,
                grid=(n_row_tiles,),
                in_specs=[
                    pl.BlockSpec((tm, dp), lambda i: (i, 0)),   # x rows
                    pl.BlockSpec((dp, mp), lambda i: (0, 0)),   # W1 (resident)
                    pl.BlockSpec((1, mp), lambda i: (0, 0)),    # b1 (resident)
                    pl.BlockSpec((mp, dp), lambda i: (0, 0)),   # W2 (resident)
                    pl.BlockSpec((1, dp), lambda i: (0, 0)),    # b2 (resident)
                ],
                out_specs=pl.BlockSpec((tm, dp), lambda i: (i, 0)),
            ),
            compiler_params=pltpu.CompilerParams(
                dimension_semantics=("parallel",),
                vmem_limit_bytes=int(budget),
            ),
            cost_estimate=cost,
        )(x2d, w1p, b1p, w2p, b2p)
    else:
        # weights re-streamed once per row tile in this mode
        cost = pl.CostEstimate(
            flops=flops, transcendentals=0,
            bytes_accessed=act_bytes + weight_bytes * n_row_tiles + bias_bytes)
        out2d = pl.pallas_call(
            _ffn_streaming_kernel,
            out_shape=jax.ShapeDtypeStruct((Mp, dp), out_dtype),
            grid_spec=pltpu.PrefetchScalarGridSpec(
                num_scalar_prefetch=0,
                grid=(n_row_tiles, mp // th),
                in_specs=[
                    pl.BlockSpec((tm, dp), lambda i, h: (i, 0)),   # x rows (resident over h)
                    pl.BlockSpec((dp, th), lambda i, h: (0, h)),   # W1 hidden slice
                    pl.BlockSpec((1, th), lambda i, h: (0, h)),    # b1 hidden slice
                    pl.BlockSpec((th, dp), lambda i, h: (h, 0)),   # W2 hidden slice
                    pl.BlockSpec((1, dp), lambda i, h: (0, 0)),    # b2 (constant)
                ],
                out_specs=pl.BlockSpec((tm, dp), lambda i, h: (i, 0)),
                scratch_shapes=[pltpu.VMEM((tm, dp), jnp.float32)],
            ),
            compiler_params=pltpu.CompilerParams(
                dimension_semantics=("parallel", "arbitrary"),
                vmem_limit_bytes=int(budget),
            ),
            cost_estimate=cost,
        )(x2d, w1p, b1p, w2p, b2p)

    return out2d[:M, :d_model].reshape(*lead_shape, d_model)


def init_params(key, d_model, middle_dim):
    """Deterministic init matching nn.Linear's U(-1/sqrt(fan_in), 1/sqrt(fan_in))."""
    k1, k2, k3, k4 = jax.random.split(key, 4)
    bound1 = 1.0 / (d_model ** 0.5)
    bound2 = 1.0 / (middle_dim ** 0.5)
    # stored pre-transposed: (in_features, out_features)
    w1 = jax.random.uniform(k1, (d_model, middle_dim), jnp.float32, -bound1, bound1)
    b1 = jax.random.uniform(k2, (middle_dim,), jnp.float32, -bound1, bound1)
    w2 = jax.random.uniform(k3, (middle_dim, d_model), jnp.float32, -bound2, bound2)
    b2 = jax.random.uniform(k4, (d_model,), jnp.float32, -bound2, bound2)
    return w1, b1, w2, b2


if __name__ == "__main__":
    key = jax.random.PRNGKey(0)
    kx, kp = jax.random.split(key)

    B, S, d_model, middle_dim = 2, 8, 32, 64
    x = jax.random.normal(kx, (B, S, d_model), dtype=jnp.float32)
    w1, b1, w2, b2 = init_params(kp, d_model, middle_dim)

    params = prepare_ffn_params(w1, b1, w2, b2)   # pad + cast weights once
    out = feedforward(x, params)
    out = jax.block_until_ready(out)

    # Reference with matching bf16 matmul operands / f32 accumulation.
    xb = x.reshape(-1, d_model).astype(jnp.bfloat16)
    h_ref = jnp.maximum(
        jnp.dot(xb, w1.astype(jnp.bfloat16), preferred_element_type=jnp.float32) + b1, 0.0)
    ref = jnp.dot(h_ref.astype(jnp.bfloat16), w2.astype(jnp.bfloat16),
                  preferred_element_type=jnp.float32) + b2
    ref = ref.reshape(B, S, d_model)
    assert jnp.allclose(out, ref, atol=2e-3, rtol=2e-3), "mismatch vs bf16 reference"

    # Loose check against the pure-f32 reference (guards against semantic errors).
    ref32 = jnp.maximum(x.reshape(-1, d_model) @ w1 + b1, 0.0) @ w2 + b2
    ref32 = ref32.reshape(B, S, d_model)
    assert jnp.allclose(out, ref32, atol=5e-2, rtol=5e-2), "mismatch vs f32 reference"

    print("KERNEL_OK")
</pallas_src>

<mosaic_0001>
module attributes {stable_mosaic.version = 11 : i64} {
  func.func @_ffn_resident_kernel(%arg0: i32, %arg1: memref<16x128xf32, #tpu.memory_space<vmem>>, %arg2: memref<128x128xbf16, #tpu.memory_space<vmem>>, %arg3: memref<1x128xf32, #tpu.memory_space<vmem>>, %arg4: memref<128x128xbf16, #tpu.memory_space<vmem>>, %arg5: memref<1x128xf32, #tpu.memory_space<vmem>>, %arg6: memref<16x128xf32, #tpu.memory_space<vmem>>) attributes {dimension_semantics = [#tpu.dimension_semantics<parallel>], iteration_bounds = array<i64: 1>, scalar_prefetch = 0 : i64, scratch_operands = 0 : i64, tpu.core_type = #tpu.core_type<tc>, window_params = [{transform_indices = @transform_0, window_bounds = array<i64: 16, 128>}, {pipeline_mode = #tpu.pipeline_mode<synchronous>, transform_indices = @transform_1, window_bounds = array<i64: 128, 128>}, {pipeline_mode = #tpu.pipeline_mode<synchronous>, transform_indices = @transform_2, window_bounds = array<i64: 1, 128>}, {pipeline_mode = #tpu.pipeline_mode<synchronous>, transform_indices = @transform_3, window_bounds = array<i64: 128, 128>}, {pipeline_mode = #tpu.pipeline_mode<synchronous>, transform_indices = @transform_4, window_bounds = array<i64: 1, 128>}, {transform_indices = @transform_5, window_bounds = array<i64: 16, 128>}]} {
    %c0 = arith.constant 0 : index
    %c0_0 = arith.constant 0 : index
    %0 = vector.load %arg1[%c0, %c0_0] : memref<16x128xf32, #tpu.memory_space<vmem>>, vector<16x128xf32>
    %1 = arith.truncf %0 : vector<16x128xf32> to vector<16x128xbf16>
    %c0_1 = arith.constant 0 : index
    %c0_2 = arith.constant 0 : index
    %2 = vector.load %arg2[%c0_1, %c0_2] : memref<128x128xbf16, #tpu.memory_space<vmem>>, vector<128x128xbf16>
    %cst = arith.constant dense<0.000000e+00> : vector<16x128xf32>
    %3 = tpu.matmul %1, %2, %cst {dimension_numbers = #tpu.dot_dimension_numbers<[1], [0], [0], [1], [0, 0, 1, 1], [], []>} : vector<16x128xbf16>, vector<128x128xbf16>, vector<16x128xf32> -> vector<16x128xf32>
    %c0_3 = arith.constant 0 : index
    %c0_4 = arith.constant 0 : index
    %4 = vector.load %arg3[%c0_3, %c0_4] : memref<1x128xf32, #tpu.memory_space<vmem>>, vector<1x128xf32>
    %5 = vector.broadcast %4 : vector<1x128xf32> to vector<16x128xf32>
    %6 = arith.addf %3, %5 : vector<16x128xf32>
    %cst_5 = arith.constant 0.000000e+00 : f32
    %7 = vector.broadcast %cst_5 : f32 to vector<16x128xf32>
    %8 = arith.maximumf %6, %7 : vector<16x128xf32>
    %9 = arith.truncf %8 : vector<16x128xf32> to vector<16x128xbf16>
    %c0_6 = arith.constant 0 : index
    %c0_7 = arith.constant 0 : index
    %10 = vector.load %arg4[%c0_6, %c0_7] : memref<128x128xbf16, #tpu.memory_space<vmem>>, vector<128x128xbf16>
    %cst_8 = arith.constant dense<0.000000e+00> : vector<16x128xf32>
    %11 = tpu.matmul %9, %10, %cst_8 {dimension_numbers = #tpu.dot_dimension_numbers<[1], [0], [0], [1], [0, 0, 1, 1], [], []>} : vector<16x128xbf16>, vector<128x128xbf16>, vector<16x128xf32> -> vector<16x128xf32>
    %c0_9 = arith.constant 0 : index
    %c0_10 = arith.constant 0 : index
    %12 = vector.load %arg5[%c0_9, %c0_10] : memref<1x128xf32, #tpu.memory_space<vmem>>, vector<1x128xf32>
    %13 = vector.broadcast %12 : vector<1x128xf32> to vector<16x128xf32>
    %14 = arith.addf %11, %13 : vector<16x128xf32>
    %c0_11 = arith.constant 0 : index
    %c0_12 = arith.constant 0 : index
    %15 = vector.load %arg6[%c0_11, %c0_12] : memref<16x128xf32, #tpu.memory_space<vmem>>, vector<16x128xf32>
    tpu.vector_store %arg6[%c0_11, %c0_12], %14 {strides = array<i32>} : memref<16x128xf32, #tpu.memory_space<vmem>>, vector<16x128xf32>,
    return
  }
  func.func @transform_0(%arg0: i32) -> (i32, i32) {
    %c0_i32 = arith.constant 0 : i32
    %c0_i32_0 = arith.constant 0 : i32
    return %arg0, %c0_i32 : i32, i32
  }
  func.func @transform_1(%arg0: i32) -> (i32, i32) {
    %c0_i32 = arith.constant 0 : i32
    %c0_i32_0 = arith.constant 0 : i32
    %c0_i32_1 = arith.constant 0 : i32
    return %c0_i32, %c0_i32_0 : i32, i32
  }
  func.func @transform_2(%arg0: i32) -> (i32, i32) {
    %c0_i32 = arith.constant 0 : i32
    %c0_i32_0 = arith.constant 0 : i32
    %c0_i32_1 = arith.constant 0 : i32
    return %c0_i32, %c0_i32_0 : i32, i32
  }
  func.func @transform_3(%arg0: i32) -> (i32, i32) {
    %c0_i32 = arith.constant 0 : i32
    %c0_i32_0 = arith.constant 0 : i32
    %c0_i32_1 = arith.constant 0 : i32
    return %c0_i32, %c0_i32_0 : i32, i32
  }
  func.func @transform_4(%arg0: i32) -> (i32, i32) {
    %c0_i32 = arith.constant 0 : i32
    %c0_i32_0 = arith.constant 0 : i32
    %c0_i32_1 = arith.constant 0 : i32
    return %c0_i32, %c0_i32_0 : i32, i32
  }
  func.func @transform_5(%arg0: i32) -> (i32, i32) {
    %c0_i32 = arith.constant 0 : i32
    %c0_i32_0 = arith.constant 0 : i32
    return %arg0, %c0_i32 : i32, i32
  }
}

</mosaic_0001>

<llo_original>
// kernel: tpu_custom_call.1
$region0: #{tpu_custom_call.1}
  #allocation0 [shape = 'u32[]', space=smem, size = 0x4, offset = 0x4, fixed_abs, tag = 'smem constant byte address 0x4 - core index']
  #allocation1 [shape = 'u32[72,128]{1,0:T(1,128)}', space=vmem, size = 0x9000, scoped, tag = 'internal scratch']
  %s0 = inlined_call_operand.hbm [shape: f32[16,128], index: 0, kind: input, shape index: {}]
  %s1 = inlined_call_operand.hbm [shape: bf16[128,128], index: 1, kind: input, shape index: {}]
  %s2 = inlined_call_operand.vmem [shape: f32[1,128], index: 2, kind: input, shape index: {}]
  %s3 = inlined_call_operand.hbm [shape: bf16[128,128], index: 3, kind: input, shape index: {}]
  %s4 = inlined_call_operand.vmem [shape: f32[1,128], index: 4, kind: input, shape index: {}]
  %s5 = inlined_call_operand.hbm [shape: f32[16,128], index: 5, kind: output, shape index: {}]
  %s6 = sld [smem:[#allocation0]]
  $region42: #{tpu_custom_call.1} parent=0
    _
  %s8 = ssub.s32 1, %s6
  %s9 = scalar_select 0, %s8, %s6
  $region1: #{tpu_custom_call.1} parent=0
    #allocation2 [shape = 'u8[8192]{0}', space=vmem, size = 0x2000, scoped, tag = 'input window, operand 0, single buffered']
    #allocation3 [shape = 's32[1]{0}', space=sflag, size = 0x4, scoped, tag = 'scoped memory for tpu_custom_call.1']
    #allocation4 [shape = 's32[1]{0}', space=sflag, size = 0x4, scoped, tag = 'scoped memory for tpu_custom_call.1']
    #allocation5 [shape = 'u8[32768]{0}', space=vmem, size = 0x8000, scoped, tag = 'input window, operand 1, single buffered']
    #allocation6 [shape = 's32[1]{0}', space=sflag, size = 0x4, scoped, tag = 'scoped memory for tpu_custom_call.1']
    #allocation7 [shape = 'u8[32768]{0}', space=vmem, size = 0x8000, scoped, tag = 'input window, operand 3, single buffered']
    #allocation8 [shape = 'u8[8192]{0}', space=vmem, size = 0x2000, scoped, tag = 'output window, operand 0, single buffered']
    %10 = vsyncpa [#allocation3], 0
    %11 = vsyncpa [#allocation6], 0
    %12 = vsyncpa [#allocation4], 0
    // Predicated region
    $region2: #{tpu_custom_call.1} parent=1 // pred_check
      _
    $region3: #{tpu_custom_call.1} parent=1 // pred_check_branch
      %14 = sbr.rel (0) target = $region5
    $region4: #{tpu_custom_call.1} parent=1 // pred_region
      %16 = vsyncadd [#allocation3], 0
      %s17 = sshll.u32 %s0, 4
      %s18 = int_to_ptr.hbm [resolvable:$true] %s17
      %s19 = sshll.u32 [#allocation2], 4
      %s20 = int_to_ptr.vmem [resolvable:$true] %s19
      %25 = dma.hbm_to_vmem [thread:$0]  %s18, 256, %s20, [#allocation3], 128, 128, 8
    $region5: #{tpu_custom_call.1} parent=1 // pred_fallthru
      _
    // Predicated region
    $region6: #{tpu_custom_call.1} parent=1 // pred_check
      _
    $region7: #{tpu_custom_call.1} parent=1 // pred_check_branch
      %27 = sbr.rel (0) target = $region9
    $region8: #{tpu_custom_call.1} parent=1 // pred_region
      %29 = vsyncadd [#allocation6], 0
      %s30 = sshll.u32 %s1, 4
      %s31 = int_to_ptr.hbm [resolvable:$true] %s30
      %s32 = sshll.u32 [#allocation5], 4
      %s33 = int_to_ptr.vmem [resolvable:$true] %s32
      %38 = dma.hbm_to_vmem [thread:$0]  %s31, 1024, %s33, [#allocation6], 64, 64, 4
    $region9: #{tpu_custom_call.1} parent=1 // pred_fallthru
      _
    // Predicated region
    $region10: #{tpu_custom_call.1} parent=1 // pred_check
      _
    $region11: #{tpu_custom_call.1} parent=1 // pred_check_branch
      %40 = sbr.rel (0) target = $region13
    $region12: #{tpu_custom_call.1} parent=1 // pred_region
      _
    $region13: #{tpu_custom_call.1} parent=1 // pred_fallthru
      _
    // Predicated region
    $region14: #{tpu_custom_call.1} parent=1 // pred_check
      _
    $region15: #{tpu_custom_call.1} parent=1 // pred_check_branch
      %42 = sbr.rel (0) target = $region17
    $region16: #{tpu_custom_call.1} parent=1 // pred_region
      %44 = vsyncadd [#allocation6], 0
      %s45 = sshll.u32 %s3, 4
      %s46 = int_to_ptr.hbm [resolvable:$true] %s45
      %s47 = sshll.u32 [#allocation7], 4
      %s48 = int_to_ptr.vmem [resolvable:$true] %s47
      %53 = dma.hbm_to_vmem [thread:$0]  %s46, 1024, %s48, [#allocation6], 64, 64, 4
    $region17: #{tpu_custom_call.1} parent=1 // pred_fallthru
      _
    // Predicated region
    $region18: #{tpu_custom_call.1} parent=1 // pred_check
      _
    $region19: #{tpu_custom_call.1} parent=1 // pred_check_branch
      %55 = sbr.rel (0) target = $region21
    $region20: #{tpu_custom_call.1} parent=1 // pred_region
      _
    $region21: #{tpu_custom_call.1} parent=1 // pred_fallthru
      _
    // Predicated region
    $region22: #{tpu_custom_call.1} parent=1 // pred_check
      _
    $region23: #{tpu_custom_call.1} parent=1 // pred_check_branch
      %57 = sbr.rel (0) target = $region25
    $region24: #{tpu_custom_call.1} parent=1 // pred_region
      %59 = dma.done [#allocation3], 256
    $region25: #{tpu_custom_call.1} parent=1 // pred_fallthru
      _
    // Predicated region
    $region26: #{tpu_custom_call.1} parent=1 // pred_check
      _
    $region27: #{tpu_custom_call.1} parent=1 // pred_check_branch
      %61 = sbr.rel (0) target = $region29
    $region28: #{tpu_custom_call.1} parent=1 // pred_region
      %63 = dma.done [#allocation6], 1024
    $region29: #{tpu_custom_call.1} parent=1 // pred_fallthru
      _
    // Predicated region
    $region30: #{tpu_custom_call.1} parent=1 // pred_check
      _
    $region31: #{tpu_custom_call.1} parent=1 // pred_check_branch
      %65 = sbr.rel (0) target = $region33
    $region32: #{tpu_custom_call.1} parent=1 // pred_region
      %67 = dma.done [#allocation6], 1024
    $region33: #{tpu_custom_call.1} parent=1 // pred_fallthru
      _
    %v68 = vld [vmem:[#allocation2] sm:$0xff]
    %v69 = vld [vmem:[#allocation2 + $0x8] sm:$0xff]
    %v70 = vpack.c.bf16 %v69, %v68
    %v71 = vld [vmem:[#allocation5] sm:$0xf]
    %v72 = vld [vmem:[#allocation5 + $0x4] sm:$0xf]
    %v73 = vld [vmem:[#allocation5 + $0x8] sm:$0xf]
    %v74 = vld [vmem:[#allocation5 + $0xc] sm:$0xf]
    %v75 = vld [vmem:[#allocation5 + $0x10] sm:$0xf]
    %v76 = vld [vmem:[#allocation5 + $0x14] sm:$0xf]
    %v77 = vld [vmem:[#allocation5 + $0x18] sm:$0xf]
    %v78 = vld [vmem:[#allocation5 + $0x1c] sm:$0xf]
    %v79 = vld [vmem:[#allocation5 + $0x20] sm:$0xf]
    %v80 = vld [vmem:[#allocation5 + $0x24] sm:$0xf]
    %v81 = vld [vmem:[#allocation5 + $0x28] sm:$0xf]
    %v82 = vld [vmem:[#allocation5 + $0x2c] sm:$0xf]
    %v83 = vld [vmem:[#allocation5 + $0x30] sm:$0xf]
    %v84 = vld [vmem:[#allocation5 + $0x34] sm:$0xf]
    %v85 = vld [vmem:[#allocation5 + $0x38] sm:$0xf]
    %v86 = vld [vmem:[#allocation5 + $0x3c] sm:$0xf]
    %v87 = vld [vmem:[%s2] sm:$0x1]
    %v89 = vperm.slane %v87, 0
    %v107 = vunpack.c.l.b16 %v71
    %v108 = vunpack.c.l.b16 %v72
    %v109 = vunpack.c.l.b16 %v73
    %v110 = vunpack.c.l.b16 %v74
    %v111 = vunpack.c.l.b16 %v75
    %v112 = vunpack.c.l.b16 %v76
    %v113 = vunpack.c.l.b16 %v77
    %v114 = vunpack.c.l.b16 %v78
    %v115 = vunpack.c.l.b16 %v79
    %v116 = vunpack.c.l.b16 %v80
    %v117 = vunpack.c.l.b16 %v81
    %v118 = vunpack.c.l.b16 %v82
    %v119 = vunpack.c.l.b16 %v83
    %v120 = vunpack.c.l.b16 %v84
    %v121 = vunpack.c.l.b16 %v85
    %v122 = vunpack.c.l.b16 %v86
    %v123 = vpack.c.b16 %v108, %v107
    %v124 = vpack.c.b16 %v110, %v109
    %v125 = vpack.c.b16 %v112, %v111
    %v126 = vpack.c.b16 %v114, %v113
    %v127 = vpack.c.b16 %v116, %v115
    %v128 = vpack.c.b16 %v118, %v117
    %v129 = vpack.c.b16 %v120, %v119
    %v130 = vpack.c.b16 %v122, %v121
    %139 = vmatpush.bf16.msra.mxu0 %v130
    %140 = vmatpush.bf16.msra.mxu0 %v129
    %141 = vmatpush.bf16.msra.mxu0 %v128
    %142 = vmatpush.bf16.msra.mxu0 %v127
    %143 = vmatpush.bf16.msra.mxu0 %v126
    %144 = vmatpush.bf16.msra.mxu0 %v125
    %145 = vmatpush.bf16.msra.mxu0 %v124
    %146 = vmatpush.bf16.msra.mxu0 %v123
    %147 = vmatmul.bf16.gmra.mxu0 %v70
    %v148 = vpop.f32.mrf.mxu0
    %v149 = vadd.f32 %v89, %v148
    %v150 = vpop.f32.mrf.mxu0
    %v151 = vadd.f32 %v89, %v150
    %152 = vdwg.mxu0
    %v153 = vmax.f32 %v149, 0.0
    %v154 = vmax.f32 %v151, 0.0
    %v155 = vpack.c.bf16 %v154, %v153
    %v156 = vld [vmem:[#allocation7] sm:$0xf]
    %v157 = vld [vmem:[#allocation7 + $0x4] sm:$0xf]
    %v158 = vld [vmem:[#allocation7 + $0x8] sm:$0xf]
    %v159 = vld [vmem:[#allocation7 + $0xc] sm:$0xf]
    %v160 = vld [vmem:[#allocation7 + $0x10] sm:$0xf]
    %v161 = vld [vmem:[#allocation7 + $0x14] sm:$0xf]
    %v162 = vld [vmem:[#allocation7 + $0x18] sm:$0xf]
    %v163 = vld [vmem:[#allocation7 + $0x1c] sm:$0xf]
    %v164 = vld [vmem:[#allocation7 + $0x20] sm:$0xf]
    %v165 = vld [vmem:[#allocation7 + $0x24] sm:$0xf]
    %v166 = vld [vmem:[#allocation7 + $0x28] sm:$0xf]
    %v167 = vld [vmem:[#allocation7 + $0x2c] sm:$0xf]
    %v168 = vld [vmem:[#allocation7 + $0x30] sm:$0xf]
    %v169 = vld [vmem:[#allocation7 + $0x34] sm:$0xf]
    %v170 = vld [vmem:[#allocation7 + $0x38] sm:$0xf]
    %v171 = vld [vmem:[#allocation7 + $0x3c] sm:$0xf]
    %v172 = vld [vmem:[%s4] sm:$0x1]
    %v174 = vperm.slane %v172, 0
    %v192 = vunpack.c.l.b16 %v156
    %v193 = vunpack.c.l.b16 %v157
    %v194 = vunpack.c.l.b16 %v158
    %v195 = vunpack.c.l.b16 %v159
    %v196 = vunpack.c.l.b16 %v160
    %v197 = vunpack.c.l.b16 %v161
    %v198 = vunpack.c.l.b16 %v162
    %v199 = vunpack.c.l.b16 %v163
    %v200 = vunpack.c.l.b16 %v164
    %v201 = vunpack.c.l.b16 %v165
    %v202 = vunpack.c.l.b16 %v166
    %v203 = vunpack.c.l.b16 %v167
    %v204 = vunpack.c.l.b16 %v168
    %v205 = vunpack.c.l.b16 %v169
    %v206 = vunpack.c.l.b16 %v170
    %v207 = vunpack.c.l.b16 %v171
    %v208 = vpack.c.b16 %v193, %v192
    %v209 = vpack.c.b16 %v195, %v194
    %v210 = vpack.c.b16 %v197, %v196
    %v211 = vpack.c.b16 %v199, %v198
    %v212 = vpack.c.b16 %v201, %v200
    %v213 = vpack.c.b16 %v203, %v202
    %v214 = vpack.c.b16 %v205, %v204
    %v215 = vpack.c.b16 %v207, %v206
    %224 = vmatpush.bf16.msra.mxu0 %v215
    %225 = vmatpush.bf16.msra.mxu0 %v214
    %226 = vmatpush.bf16.msra.mxu0 %v213
    %227 = vmatpush.bf16.msra.mxu0 %v212
    %228 = vmatpush.bf16.msra.mxu0 %v211
    %229 = vmatpush.bf16.msra.mxu0 %v210
    %230 = vmatpush.bf16.msra.mxu0 %v209
    %231 = vmatpush.bf16.msra.mxu0 %v208
    %232 = vmatmul.bf16.gmra.mxu0 %v155
    %v233 = vpop.f32.mrf.mxu0
    %v234 = vadd.f32 %v174, %v233
    %v235 = vpop.f32.mrf.mxu0
    %v236 = vadd.f32 %v174, %v235
    %237 = vdwg.mxu0
    %238 = vst [vmem:[#allocation8] sm:$0xff] %v234
    %239 = vst [vmem:[#allocation8 + $0x8] sm:$0xff] %v236
    // Predicated region
    $region34: #{tpu_custom_call.1} parent=1 // pred_check
      _
    $region35: #{tpu_custom_call.1} parent=1 // pred_check_branch
      %241 = sbr.rel (0) target = $region37
    $region36: #{tpu_custom_call.1} parent=1 // pred_region
      %243 = vsyncadd [#allocation4], 0
      %s244 = sshll.u32 [#allocation8], 4
      %s245 = int_to_ptr.vmem [resolvable:$true] %s244
      %s246 = sshll.u32 %s5, 4
      %s247 = int_to_ptr.hbm [resolvable:$true] %s246
      %252 = dma.vmem_to_hbm [thread:$0]  %s245, 256, %s247, [#allocation4], 128, 128, 8
    $region37: #{tpu_custom_call.1} parent=1 // pred_fallthru
      _
    // Predicated region
    $region38: #{tpu_custom_call.1} parent=1 // pred_check
      _
    $region39: #{tpu_custom_call.1} parent=1 // pred_check_branch
      %254 = sbr.rel (0) target = $region41
    $region40: #{tpu_custom_call.1} parent=1 // pred_region
      %256 = dma.done [#allocation4], 256
    $region41: #{tpu_custom_call.1} parent=1 // pred_fallthru
      _
    %257 = vsyncpa [#allocation3], 1
    %258 = vsyncpa [#allocation6], 1
    %259 = vsyncpa [#allocation4], 1

</llo_original>
